<compile_context>
chip_gen: v6e
topology: v6e:2x2x1
jax: 0.10.0
libtpu: 0.0.40
codegen_flags: <defaults>
</compile_context>

<pallas_src>
import math
import functools

import jax
import jax.numpy as jnp
from jax import lax
from jax.experimental import pallas as pl
from jax.experimental.pallas import tpu as pltpu

LN_EPS = 1e-5                      # torch.nn.LayerNorm default
NEG_INF = -1e30                    # mask value; attention scores stay f32


def _round_up(x, m):
    return ((x + m - 1) // m) * m


@functools.lru_cache(maxsize=None)
def _vmem_limit():
    """Generation-aware scoped-VMEM limit: 75% of physical VMEM, <=100 MiB."""
    try:
        cap = int(pltpu.get_tpu_info().vmem_capacity_bytes)
    except Exception:
        cap = 64 * 1024 * 1024     # conservative fallback (v7x per-TC VMEM)
    return min(cap * 3 // 4, 100 * 1024 * 1024)


def _pick_batch_tile(b):
    """Largest divisor of B giving >=2 tiles (both v7x TCs get work)."""
    # TODO(synk): also bound the tile by a VMEM-budget estimate at large B/S/D.
    if b <= 1:
        return 1
    for t in range(max(1, b // 2), 0, -1):
        if b % t == 0:
            return t
    return 1


def _pick_mlp_chunk(mlp, max_chunk=2048):
    """Largest multiple of 128 that divides the MLP hidden dim, <= max_chunk."""
    if mlp <= max_chunk:
        return mlp
    for c in range(max_chunk, 127, -128):
        if mlp % c == 0:
            return c
    return mlp


def _ln(x, g, b):
    mu = jnp.mean(x, axis=-1, keepdims=True)
    var = jnp.mean((x - mu) ** 2, axis=-1, keepdims=True)
    return (x - mu) * lax.rsqrt(var + LN_EPS) * g + b


def _gelu_erf(x):                  # exact erf GELU == torch.nn.GELU default
    return 0.5 * x * (1.0 + lax.erf(x * (1.0 / math.sqrt(2.0))))


# ----------------------------------------------------------------------------
# Pallas kernels
# ----------------------------------------------------------------------------
def tower_kernel(x_ref, ln1g, ln1b, wqkv, bqkv, wo, bo, ln2g, ln2b,
                 wfc, bfc, wpr, bpr, o_ref,
                 resid, xn2_s, mlp_acc, *, heads, causal, valid_len):
    """Whole pre-LN transformer tower.  grid = (batch_tile, layer, mlp_chunk);
    the f32 residual stream lives in VMEM scratch for the full layer sweep.
    Per layer:  x = x + attn(ln1(x));  x = x + mlp(ln2(x))  (chunked hidden)."""
    l = pl.program_id(1)
    f = pl.program_id(2)
    n_l = pl.num_programs(1)
    n_f = pl.num_programs(2)
    bt, S, D = resid.shape
    hd = D // heads
    scale = 1.0 / math.sqrt(hd)
    rows = bt * S

    @pl.when((l == 0) & (f == 0))
    def _():                                         # new batch tile
        resid[...] = x_ref[...].astype(jnp.float32)

    # ---- attention sub-block: once per layer (first MLP chunk step) ---------
    @pl.when(f == 0)
    def _():
        x = resid[...].reshape(rows, D)              # (bt*S, D) f32
        xn = _ln(x, ln1g[0, 0], ln1b[0, 0]).astype(jnp.bfloat16)
        qkv = (jnp.dot(xn, wqkv[0], preferred_element_type=jnp.float32)
               + bqkv[0, 0]).astype(jnp.bfloat16)    # (bt*S, 3D)

        need_mask = causal or (valid_len < S)        # static Python branch
        if need_mask:
            r = lax.broadcasted_iota(jnp.int32, (S, S), 0)
            c = lax.broadcasted_iota(jnp.int32, (S, S), 1)
            ok = c < valid_len                       # mask padded key columns
            if causal:
                ok = jnp.logical_and(ok, c <= r)     # causal mask from iota

        ctx_rows = []
        for bi in range(bt):                         # static, small batch tile
            sl = slice(bi * S, (bi + 1) * S)
            q = qkv[sl, 0 * D:1 * D].reshape(S, heads, hd)
            k = qkv[sl, 1 * D:2 * D].reshape(S, heads, hd)
            v = qkv[sl, 2 * D:3 * D].reshape(S, heads, hd)
            sc = jnp.einsum('qhd,khd->hqk', q, k,
                            preferred_element_type=jnp.float32) * scale
            if need_mask:
                sc = jnp.where(ok[None], sc, NEG_INF)
            m = jnp.max(sc, axis=-1, keepdims=True)
            e = jnp.exp(sc - m)
            p = e * pl.reciprocal(jnp.sum(e, axis=-1, keepdims=True),
                                  approx=True)       # EUP, frees the VALU
            ctx = jnp.einsum('hqk,khd->qhd', p.astype(jnp.bfloat16), v,
                             preferred_element_type=jnp.float32)
            ctx_rows.append(ctx.reshape(S, D))
        ctx_flat = ctx_rows[0] if bt == 1 else jnp.concatenate(ctx_rows, axis=0)

        attn = (jnp.dot(ctx_flat.astype(jnp.bfloat16), wo[0],
                        preferred_element_type=jnp.float32) + bo[0, 0])
        xa = x + attn
        resid[...] = xa.reshape(bt, S, D)
        # pre-compute ln2 once; MLP chunks reuse it from scratch (bf16)
        xn2_s[...] = _ln(xa, ln2g[0, 0], ln2b[0, 0]).astype(jnp.bfloat16)
        mlp_acc[...] = jnp.zeros_like(mlp_acc)

    # ---- MLP hidden-dim chunk: every (layer, f) step -------------------------
    h = (jnp.dot(xn2_s[...], wfc[0], preferred_element_type=jnp.float32)
         + bfc[0, 0])
    mlp_acc[...] += jnp.dot(_gelu_erf(h).astype(jnp.bfloat16), wpr[0],
                            preferred_element_type=jnp.float32)

    @pl.when(f == n_f - 1)
    def _():                                         # finish the layer
        resid[...] += (mlp_acc[...] + bpr[0, 0]).reshape(bt, S, D)

    @pl.when((l == n_l - 1) & (f == n_f - 1))
    def _():                                         # end of tower for this tile
        o_ref[...] = resid[...].astype(o_ref.dtype)


def vision_embed_kernel(p_ref, w_ref, cls_ref, pos_ref, g_ref, b_ref, o_ref,
                        *, n_tok):
    """Fused patch-embedding matmul + CLS prepend + pos-embed add + ln_pre.
    Writes the lane/sublane padded (S_pad, D) sequence directly into o_ref."""
    patches = p_ref[0].astype(jnp.bfloat16)                       # (N, K)
    emb = jnp.dot(patches, w_ref[...],
                  preferred_element_type=jnp.float32)             # (N, D)
    cls = cls_ref[...].astype(jnp.float32)                        # (1, D)
    x = jnp.concatenate([cls, emb], axis=0) + pos_ref[...]        # (n_tok, D)
    x = _ln(x, g_ref[0], b_ref[0])
    o_ref[0] = jnp.zeros(o_ref.shape[1:], o_ref.dtype)            # zero padding
    o_ref[0, 0:n_tok, :] = x.astype(o_ref.dtype)                  # sliced store


def pooled_head_kernel(x_ref, g_ref, b_ref, w_ref, o_ref):
    """Fused final LayerNorm (applied to the pooled token) + projection +
    L2 normalize (F.normalize(dim=-1))."""
    x = _ln(x_ref[...].astype(jnp.float32), g_ref[0], b_ref[0])   # (B, D)
    y = jnp.dot(x.astype(jnp.bfloat16), w_ref[...],
                preferred_element_type=jnp.float32)               # (B, E)
    inv = lax.rsqrt(jnp.maximum(jnp.sum(y * y, axis=-1, keepdims=True), 1e-24))
    o_ref[...] = (y * inv).astype(o_ref.dtype)


# ----------------------------------------------------------------------------
# pallas_call wrappers
# ----------------------------------------------------------------------------
def _const_spec(w):
    # weight blocks whose index never changes over the grid: single-buffered
    return pl.BlockSpec(w.shape, lambda b, _nd=w.ndim: (0,) * _nd,
                        pipeline_mode=pl.Buffered(1))


def run_tower(x, stacked, heads, causal, valid_len):
    """One pallas_call for the whole transformer tower of one modality."""
    B, S, D = x.shape
    n_layers = stacked['w_qkv'].shape[0]
    mlp = stacked['w_fc'].shape[-1]
    hf = _pick_mlp_chunk(mlp)
    n_f = mlp // hf
    bt = _pick_batch_tile(B)
    nb = B // bt

    names = ['ln1_g', 'ln1_b', 'w_qkv', 'b_qkv', 'w_o', 'b_o',
             'ln2_g', 'ln2_b', 'w_fc', 'b_fc', 'w_pr', 'b_pr']
    w_args = [stacked[n] for n in names]

    def l00(b, l, f): return (l, 0, 0)
    def l0f(b, l, f): return (l, 0, f)
    def lf0(b, l, f): return (l, f, 0)
    def vec(last): return pl.BlockSpec((1, 1, last), l00)

    spec_map = dict(
        ln1_g=vec(D), ln1_b=vec(D),
        w_qkv=pl.BlockSpec((1, D, 3 * D), l00), b_qkv=vec(3 * D),
        w_o=pl.BlockSpec((1, D, D), l00), b_o=vec(D),
        ln2_g=vec(D), ln2_b=vec(D),
        w_fc=pl.BlockSpec((1, D, hf), l0f),
        b_fc=pl.BlockSpec((1, 1, hf), l0f),
        w_pr=pl.BlockSpec((1, hf, D), lf0),
        b_pr=vec(D),
    )
    in_specs = [pl.BlockSpec((bt, S, D), lambda b, l, f: (b, 0, 0))]
    in_specs += [spec_map[n] for n in names]

    flops = 2 * B * n_layers * S * (4 * D * D + 2 * D * mlp + 2 * S * D)
    trans = B * n_layers * S * (mlp + heads * S)
    nbytes = n_layers * (4 * D * D + 2 * D * mlp) * 2 + 2 * B * S * D * 4

    return pl.pallas_call(
        functools.partial(tower_kernel, heads=heads, causal=causal,
                          valid_len=valid_len),
        out_shape=jax.ShapeDtypeStruct((B, S, D), jnp.float32),
        grid=(nb, n_layers, n_f),
        in_specs=in_specs,
        out_specs=pl.BlockSpec((bt, S, D), lambda b, l, f: (b, 0, 0)),
        scratch_shapes=[pltpu.VMEM((bt, S, D), jnp.float32),       # residual
                        pltpu.VMEM((bt * S, D), jnp.bfloat16),     # ln2(x)
                        pltpu.VMEM((bt * S, D), jnp.float32)],     # mlp accum
        compiler_params=pltpu.CompilerParams(
            dimension_semantics=("parallel", "arbitrary", "arbitrary"),
            vmem_limit_bytes=_vmem_limit()),
        cost_estimate=pl.CostEstimate(flops=int(flops),
                                      transcendentals=int(trans),
                                      bytes_accessed=int(nbytes)),
    )(x, *w_args)


def run_vision_embed(patches, vp, n_tok, s_pad):
    B, N, K = patches.shape
    D = vp['conv_w'].shape[1]
    weights = [vp['conv_w'], vp['cls'], vp['pos'],
               vp['ln_pre_g'], vp['ln_pre_b']]
    in_specs = [pl.BlockSpec((1, N, K), lambda b: (b, 0, 0))]
    in_specs += [_const_spec(w) for w in weights]
    return pl.pallas_call(
        functools.partial(vision_embed_kernel, n_tok=n_tok),
        out_shape=jax.ShapeDtypeStruct((B, s_pad, D), jnp.float32),
        grid=(B,),
        in_specs=in_specs,
        out_specs=pl.BlockSpec((1, s_pad, D), lambda b: (b, 0, 0)),
        compiler_params=pltpu.CompilerParams(
            dimension_semantics=("parallel",),
            vmem_limit_bytes=_vmem_limit()),
        cost_estimate=pl.CostEstimate(
            flops=int(2 * B * N * K * D), transcendentals=0,
            bytes_accessed=int(B * N * K * 4 + B * s_pad * D * 4)),
    )(patches, *weights)


def run_pooled_head(pooled, g, b, proj):
    B, _ = pooled.shape
    E = proj.shape[1]
    # whole arrays fit in single VMEM blocks (shapes are small)
    return pl.pallas_call(
        pooled_head_kernel,
        out_shape=jax.ShapeDtypeStruct((B, E), jnp.float32),
        compiler_params=pltpu.CompilerParams(vmem_limit_bytes=_vmem_limit()),
    )(pooled, g, b, proj)


# ----------------------------------------------------------------------------
# Parameters (deterministic synthetic init — NOT a checkpoint load)
# ----------------------------------------------------------------------------
def init_block(key, d, mlp):
    ks = jax.random.split(key, 4)
    s = d ** -0.5
    f32, bf16 = jnp.float32, jnp.bfloat16
    return dict(
        ln1_g=jnp.ones((1, d), f32), ln1_b=jnp.zeros((1, d), f32),
        w_qkv=(jax.random.normal(ks[0], (d, 3 * d), f32) * s).astype(bf16),
        b_qkv=jnp.zeros((1, 3 * d), f32),
        w_o=(jax.random.normal(ks[1], (d, d), f32) * s).astype(bf16),
        b_o=jnp.zeros((1, d), f32),
        ln2_g=jnp.ones((1, d), f32), ln2_b=jnp.zeros((1, d), f32),
        w_fc=(jax.random.normal(ks[2], (d, mlp), f32) * s).astype(bf16),
        b_fc=jnp.zeros((1, mlp), f32),
        w_pr=(jax.random.normal(ks[3], (mlp, d), f32) * (mlp ** -0.5)).astype(bf16),
        b_pr=jnp.zeros((1, d), f32),
    )


def stack_blocks(blocks):
    # stack per-layer weights along a leading L axis for layer-streaming
    return {k: jnp.stack([blk[k] for blk in blocks], axis=0)
            for k in blocks[0]}


def init_clip_params(key, *, embed_dim, img_size, patch, in_ch,
                     v_width, v_layers, v_heads,
                     ctx_len, vocab, t_width, t_layers, t_heads, mlp_ratio=4):
    f32, bf16 = jnp.float32, jnp.bfloat16
    keys = jax.random.split(key, 8 + v_layers + t_layers)
    ki = iter(keys)
    grid = img_size // patch
    n_tok_v = grid * grid + 1
    vs = v_width ** -0.5
    ts = t_width ** -0.5
    vision = dict(
        conv_w=(jax.random.normal(next(ki), (in_ch * patch * patch, v_width),
                                  f32) * vs).astype(bf16),
        cls=jax.random.normal(next(ki), (1, v_width), f32) * vs,
        pos=jax.random.normal(next(ki), (n_tok_v, v_width), f32) * vs,
        ln_pre_g=jnp.ones((1, v_width), f32), ln_pre_b=jnp.zeros((1, v_width), f32),
        blocks=stack_blocks([init_block(next(ki), v_width, int(v_width * mlp_ratio))
                             for _ in range(v_layers)]),
        ln_post_g=jnp.ones((1, v_width), f32), ln_post_b=jnp.zeros((1, v_width), f32),
        proj=(jax.random.normal(next(ki), (v_width, embed_dim), f32) * vs).astype(bf16),
        heads=v_heads, patch=patch,
    )
    text = dict(
        tok_emb=jax.random.normal(next(ki), (vocab, t_width), f32) * 0.02,
        pos=jax.random.normal(next(ki), (ctx_len, t_width), f32) * 0.01,
        blocks=stack_blocks([init_block(next(ki), t_width, int(t_width * mlp_ratio))
                             for _ in range(t_layers)]),
        ln_f_g=jnp.ones((1, t_width), f32), ln_f_b=jnp.zeros((1, t_width), f32),
        proj=(jax.random.normal(next(ki), (t_width, embed_dim), f32) * ts).astype(bf16),
        heads=t_heads,
    )
    logit_scale = jnp.asarray(math.log(1.0 / 0.07), f32)   # init_logit_scale
    return dict(visual=vision, text=text, logit_scale=logit_scale)


# ----------------------------------------------------------------------------
# CLIP forward (image/text towers + normalize), mirroring CLIP.forward
# ----------------------------------------------------------------------------
def encode_image(image, vp):
    B, C, H, W = image.shape
    p = vp['patch']
    Hp, Wp = H // p, W // p
    # patchify == Conv2d(kernel=stride=patch, bias=False) + flatten (layout glue)
    patches = image.reshape(B, C, Hp, p, Wp, p)
    patches = patches.transpose(0, 2, 4, 1, 3, 5).reshape(B, Hp * Wp, C * p * p)
    n_tok = Hp * Wp + 1
    s_pad = _round_up(n_tok, 128)              # lane-dense sequence / score dim
    # fused: patch-embed matmul + CLS prepend + pos add + ln_pre
    x = run_vision_embed(patches, vp, n_tok, s_pad)             # (B, s_pad, Dv)
    # fused: all residual attention blocks in one pallas_call
    x = run_tower(x, vp['blocks'], vp['heads'], causal=False, valid_len=n_tok)
    pooled = x[:, 0]                                            # pool_type='tok'
    # fused: ln_post (per-token) + proj + L2 normalize
    return run_pooled_head(pooled, vp['ln_post_g'], vp['ln_post_b'], vp['proj'])


def encode_text(text, tp):
    B, L = text.shape
    # TODO(synk): token-embedding gather and the argmax pooling index are
    # data-dependent gathers and stay in plain JAX glue.
    x = jnp.take(tp['tok_emb'], text, axis=0) + tp['pos'][None, :L]
    l_pad = _round_up(L, 128)                  # lane-dense sequence / score dim
    x = jnp.pad(x, ((0, 0), (0, l_pad - L), (0, 0)))
    x = run_tower(x, tp['blocks'], tp['heads'], causal=True, valid_len=L)
    eot = jnp.argmax(text, axis=-1)                             # pool_type='argmax'
    pooled = x[jnp.arange(B), eot]
    # fused: ln_final (per-token) + text_projection + L2 normalize
    return run_pooled_head(pooled, tp['ln_f_g'], tp['ln_f_b'], tp['proj'])


def clip_forward(params, image, text):
    image_features = encode_image(image, params['visual'])
    text_features = encode_text(text, params['text'])
    return image_features, text_features, jnp.exp(params['logit_scale'])


# ----------------------------------------------------------------------------
if __name__ == "__main__":
    # small CLIP config: embed_dim=128; vision: 32x32 img, patch 8, width 128,
    # 2 layers, 2 heads (head_width 64); text: ctx 8, vocab 128, width 128,
    # 2 layers, 2 heads.  width=128 keeps the lane dimension dense.
    key = jax.random.PRNGKey(0)
    kp, ki, kt = jax.random.split(key, 3)
    EMBED = 128
    params = init_clip_params(
        kp, embed_dim=EMBED, img_size=32, patch=8, in_ch=3,
        v_width=128, v_layers=2, v_heads=2,
        ctx_len=8, vocab=128, t_width=128, t_layers=2, t_heads=2)

    image = jax.random.normal(ki, (2, 3, 32, 32), jnp.float32)     # NCHW
    text = jax.random.randint(kt, (2, 8), 1, 128, dtype=jnp.int32)

    img_feats, txt_feats, logit_scale = clip_forward(params, image, text)
    jax.block_until_ready((img_feats, txt_feats, logit_scale))

    # sanity: shapes, finiteness, and L2-normalized features
    assert img_feats.shape == (2, EMBED) and txt_feats.shape == (2, EMBED)
    assert bool(jnp.isfinite(img_feats).all()) and bool(jnp.isfinite(txt_feats).all())
    assert jnp.allclose(jnp.linalg.norm(img_feats, axis=-1), 1.0, atol=1e-3)
    assert jnp.allclose(jnp.linalg.norm(txt_feats, axis=-1), 1.0, atol=1e-3)

    print("KERNEL_OK")
</pallas_src>

<mosaic_0001>
module attributes {stable_mosaic.version = 11 : i64} {
  func.func @vision_embed_kernel(%arg0: i32, %arg1: memref<1x16x192xf32, #tpu.memory_space<vmem>>, %arg2: memref<192x128xbf16, #tpu.memory_space<vmem>>, %arg3: memref<1x128xf32, #tpu.memory_space<vmem>>, %arg4: memref<17x128xf32, #tpu.memory_space<vmem>>, %arg5: memref<1x128xf32, #tpu.memory_space<vmem>>, %arg6: memref<1x128xf32, #tpu.memory_space<vmem>>, %arg7: memref<1x128x128xf32, #tpu.memory_space<vmem>>) attributes {dimension_semantics = [#tpu.dimension_semantics<parallel>], iteration_bounds = array<i64: 2>, scalar_prefetch = 0 : i64, scratch_operands = 0 : i64, tpu.core_type = #tpu.core_type<tc>, window_params = [{transform_indices = @transform_0, window_bounds = array<i64: 1, 16, 192>}, {pipeline_mode = #tpu.pipeline_mode<synchronous>, transform_indices = @transform_1, window_bounds = array<i64: 192, 128>}, {pipeline_mode = #tpu.pipeline_mode<synchronous>, transform_indices = @transform_2, window_bounds = array<i64: 1, 128>}, {pipeline_mode = #tpu.pipeline_mode<synchronous>, transform_indices = @transform_3, window_bounds = array<i64: 17, 128>}, {pipeline_mode = #tpu.pipeline_mode<synchronous>, transform_indices = @transform_4, window_bounds = array<i64: 1, 128>}, {pipeline_mode = #tpu.pipeline_mode<synchronous>, transform_indices = @transform_5, window_bounds = array<i64: 1, 128>}, {transform_indices = @transform_6, window_bounds = array<i64: 1, 128, 128>}]} {
    %c0 = arith.constant 0 : index
    %c0_0 = arith.constant 0 : index
    %c0_1 = arith.constant 0 : index
    %0 = vector.load %arg1[%c0, %c0_0, %c0_1] : memref<1x16x192xf32, #tpu.memory_space<vmem>>, vector<1x16x192xf32>
    %1 = vector.shape_cast %0 : vector<1x16x192xf32> to vector<16x192xf32>
    %2 = arith.truncf %1 : vector<16x192xf32> to vector<16x192xbf16>
    %c0_2 = arith.constant 0 : index
    %c0_3 = arith.constant 0 : index
    %3 = vector.load %arg2[%c0_2, %c0_3] : memref<192x128xbf16, #tpu.memory_space<vmem>>, vector<192x128xbf16>
    %cst = arith.constant dense<0.000000e+00> : vector<16x128xf32>
    %4 = tpu.matmul %2, %3, %cst {dimension_numbers = #tpu.dot_dimension_numbers<[1], [0], [0], [1], [0, 0, 1, 1], [], []>} : vector<16x192xbf16>, vector<192x128xbf16>, vector<16x128xf32> -> vector<16x128xf32>
    %c0_4 = arith.constant 0 : index
    %c0_5 = arith.constant 0 : index
    %5 = vector.load %arg3[%c0_4, %c0_5] : memref<1x128xf32, #tpu.memory_space<vmem>>, vector<1x128xf32>
    %6 = tpu.concatenate %5, %4 in 0 : vector<1x128xf32>, vector<16x128xf32> -> vector<17x128xf32>
    %c0_6 = arith.constant 0 : index
    %c0_7 = arith.constant 0 : index
    %7 = vector.load %arg4[%c0_6, %c0_7] : memref<17x128xf32, #tpu.memory_space<vmem>>, vector<17x128xf32>
    %8 = arith.addf %6, %7 : vector<17x128xf32>
    %c0_8 = arith.constant 0 : index
    %c0_9 = arith.constant 0 : index
    %9 = vector.load %arg5[%c0_8, %c0_9] : memref<1x128xf32, #tpu.memory_space<vmem>>, vector<1x128xf32>
    %10 = vector.shape_cast %9 : vector<1x128xf32> to vector<128xf32>
    %c0_10 = arith.constant 0 : index
    %c0_11 = arith.constant 0 : index
    %11 = vector.load %arg6[%c0_10, %c0_11] : memref<1x128xf32, #tpu.memory_space<vmem>>, vector<1x128xf32>
    %12 = vector.shape_cast %11 : vector<1x128xf32> to vector<128xf32>
    %cst_12 = arith.constant dense<0.000000e+00> : vector<17xf32>
    %13 = vector.multi_reduction <add>, %8, %cst_12 [1] : vector<17x128xf32> to vector<17xf32>
    %14 = vector.shape_cast %13 : vector<17xf32> to vector<17x1xf32>
    %cst_13 = arith.constant 1.280000e+02 : f32
    %15 = vector.broadcast %cst_13 : f32 to vector<17x1xf32>
    %16 = arith.divf %14, %15 : vector<17x1xf32>
    %17 = vector.broadcast %16 : vector<17x1xf32> to vector<17x128xf32>
    %18 = arith.subf %8, %17 : vector<17x128xf32>
    %19 = arith.mulf %18, %18 : vector<17x128xf32>
    %cst_14 = arith.constant dense<0.000000e+00> : vector<17xf32>
    %20 = vector.multi_reduction <add>, %19, %cst_14 [1] : vector<17x128xf32> to vector<17xf32>
    %21 = vector.shape_cast %20 : vector<17xf32> to vector<17x1xf32>
    %cst_15 = arith.constant 1.280000e+02 : f32
    %22 = vector.broadcast %cst_15 : f32 to vector<17x1xf32>
    %23 = arith.divf %21, %22 : vector<17x1xf32>
    %24 = vector.broadcast %16 : vector<17x1xf32> to vector<17x128xf32>
    %25 = arith.subf %8, %24 : vector<17x128xf32>
    %cst_16 = arith.constant 9.99999974E-6 : f32
    %26 = vector.broadcast %cst_16 : f32 to vector<17x1xf32>
    %27 = arith.addf %23, %26 : vector<17x1xf32>
    %28 = math.rsqrt %27 : vector<17x1xf32>
    %29 = vector.broadcast %28 : vector<17x1xf32> to vector<17x128xf32>
    %30 = arith.mulf %25, %29 : vector<17x128xf32>
    %31 = vector.shape_cast %10 : vector<128xf32> to vector<1x128xf32>
    %32 = vector.broadcast %31 : vector<1x128xf32> to vector<17x128xf32>
    %33 = arith.mulf %30, %32 : vector<17x128xf32>
    %34 = vector.shape_cast %12 : vector<128xf32> to vector<1x128xf32>
    %35 = vector.broadcast %34 : vector<1x128xf32> to vector<17x128xf32>
    %36 = arith.addf %33, %35 : vector<17x128xf32>
    %cst_17 = arith.constant 0.000000e+00 : f32
    %37 = vector.broadcast %cst_17 : f32 to vector<128x128xf32>
    %c0_18 = arith.constant 0 : index
    %c0_19 = arith.constant 0 : index
    %c0_20 = arith.constant 0 : index
    %38 = vector.load %arg7[%c0_18, %c0_19, %c0_20] : memref<1x128x128xf32, #tpu.memory_space<vmem>>, vector<1x128x128xf32>
    %39 = vector.shape_cast %38 : vector<1x128x128xf32> to vector<128x128xf32>
    %40 = vector.shape_cast %37 : vector<128x128xf32> to vector<1x128x128xf32>
    tpu.vector_store %arg7[%c0_18, %c0_19, %c0_20], %40 {strides = array<i32>} : memref<1x128x128xf32, #tpu.memory_space<vmem>>, vector<1x128x128xf32>,
    %c0_21 = arith.constant 0 : index
    %c0_22 = arith.constant 0 : index
    %c0_23 = arith.constant 0 : index
    %41 = vector.load %arg7[%c0_21, %c0_22, %c0_23] : memref<1x128x128xf32, #tpu.memory_space<vmem>>, vector<1x17x128xf32>
    %42 = vector.shape_cast %41 : vector<1x17x128xf32> to vector<17x128xf32>
    %43 = vector.shape_cast %36 : vector<17x128xf32> to vector<1x17x128xf32>
    tpu.vector_store %arg7[%c0_21, %c0_22, %c0_23], %43 {strides = array<i32>} : memref<1x128x128xf32, #tpu.memory_space<vmem>>, vector<1x17x128xf32>,
    return
  }
  func.func @transform_0(%arg0: i32) -> (i32, i32, i32) {
    %c0_i32 = arith.constant 0 : i32
    %c0_i32_0 = arith.constant 0 : i32
    %c0_i32_1 = arith.constant 0 : i32
    return %arg0, %c0_i32, %c0_i32_0 : i32, i32, i32
  }
  func.func @transform_1(%arg0: i32) -> (i32, i32) {
    %c0_i32 = arith.constant 0 : i32
    %c0_i32_0 = arith.constant 0 : i32
    %c0_i32_1 = arith.constant 0 : i32
    return %c0_i32, %c0_i32_0 : i32, i32
  }
  func.func @transform_2(%arg0: i32) -> (i32, i32) {
    %c0_i32 = arith.constant 0 : i32
    %c0_i32_0 = arith.constant 0 : i32
    %c0_i32_1 = arith.constant 0 : i32
    return %c0_i32, %c0_i32_0 : i32, i32
  }
  func.func @transform_3(%arg0: i32) -> (i32, i32) {
    %c0_i32 = arith.constant 0 : i32
    %c0_i32_0 = arith.constant 0 : i32
    %c0_i32_1 = arith.constant 0 : i32
    return %c0_i32, %c0_i32_0 : i32, i32
  }
  func.func @transform_4(%arg0: i32) -> (i32, i32) {
    %c0_i32 = arith.constant 0 : i32
    %c0_i32_0 = arith.constant 0 : i32
    %c0_i32_1 = arith.constant 0 : i32
    return %c0_i32, %c0_i32_0 : i32, i32
  }
  func.func @transform_5(%arg0: i32) -> (i32, i32) {
    %c0_i32 = arith.constant 0 : i32
    %c0_i32_0 = arith.constant 0 : i32
    %c0_i32_1 = arith.constant 0 : i32
    return %c0_i32, %c0_i32_0 : i32, i32
  }
  func.func @transform_6(%arg0: i32) -> (i32, i32, i32) {
    %c0_i32 = arith.constant 0 : i32
    %c0_i32_0 = arith.constant 0 : i32
    %c0_i32_1 = arith.constant 0 : i32
    return %arg0, %c0_i32, %c0_i32_0 : i32, i32, i32
  }
}

</mosaic_0001>

<llo_original>
// kernel: tpu_custom_call.1
$region0: #{tpu_custom_call.1}
  #allocation0 [shape = 'u32[]', space=smem, size = 0x4, offset = 0x4, fixed_abs, tag = 'smem constant byte address 0x4 - core index']
  #allocation1 [shape = 'u32[144,128]{1,0:T(1,128)}', space=vmem, size = 0x12000, scoped, tag = 'internal scratch']
  %s0 = inlined_call_operand.hbm [shape: f32[2,16,192], index: 0, kind: input, shape index: {}]
  %s1 = inlined_call_operand.hbm [shape: bf16[192,128], index: 1, kind: input, shape index: {}]
  %s2 = inlined_call_operand.vmem [shape: f32[1,128], index: 2, kind: input, shape index: {}]
  %s3 = inlined_call_operand.hbm [shape: f32[17,128], index: 3, kind: input, shape index: {}]
  %s4 = inlined_call_operand.vmem [shape: f32[1,128], index: 4, kind: input, shape index: {}]
  %s5 = inlined_call_operand.vmem [shape: f32[1,128], index: 5, kind: input, shape index: {}]
  %s6 = inlined_call_operand.hbm [shape: f32[2,128,128], index: 6, kind: output, shape index: {}]
  %s7 = sld [smem:[#allocation0]]
  $region69: #{tpu_custom_call.1} parent=0
    _
  %s9 = ssub.s32 1, %s7
  %s10 = scalar_select 0, %s9, %s7
  $region1: #{tpu_custom_call.1} parent=0
    #allocation2 [shape = 'u8[32768]{0}', space=vmem, size = 0x8000, scoped, tag = 'input window, operand 0']
    #allocation3 [shape = 's32[2]{0}', space=sflag, size = 0x8, scoped, tag = 'scoped memory for tpu_custom_call.1']
    #allocation4 [shape = 's32[2]{0}', space=sflag, size = 0x8, scoped, tag = 'scoped memory for tpu_custom_call.1']
    #allocation5 [shape = 'u8[49152]{0}', space=vmem, size = 0xc000, scoped, tag = 'input window, operand 1, single buffered']
    #allocation6 [shape = 's32[1]{0}', space=sflag, size = 0x4, scoped, tag = 'scoped memory for tpu_custom_call.1']
    #allocation7 [shape = 'u8[12288]{0}', space=vmem, size = 0x3000, scoped, tag = 'input window, operand 3, single buffered']
    #allocation8 [shape = 'u8[131072]{0}', space=vmem, size = 0x20000, scoped, tag = 'output window, operand 0']
    %11 = vsyncpa [#allocation3], 0
    %s12 = scalar_lea.sflag [#allocation3], 1
    %13 = vsyncpa %s12, 0
    %14 = vsyncpa [#allocation6], 0
    %15 = vsyncpa [#allocation4], 0
    %s16 = scalar_lea.sflag [#allocation4], 1
    %17 = vsyncpa %s16, 0
    loop: start=0, step=1, limit=4
    $region2: #{tpu_custom_call.1} parent=1 // loop_pre_header
      _
    $region3: #{tpu_custom_call.1} parent=1 // loop_header
      %s19 = sphi 0, %s23
      %p20 = scmp.ge.s32.totalorder %s19, 4
      %s29 = sphi 0, %s31
      %s32 = sphi 0, %s29
      %s33 = sphi 0, %s32
      %s49 = sphi 0, %s33
      %s53 = sphi 0, %s53
      %s55 = sphi 0, %s53
      %s56 = sphi 0, %s55
      %s70 = sphi 0, %s56
      %s74 = sphi 0, %s74
      %s76 = sphi 0, %s74
      %s77 = sphi 0, %s76
      %s91 = sphi 0, %s77
      %s95 = sphi 0, %s95
      %s97 = sphi 0, %s95
      %s98 = sphi 0, %s97
      %s112 = sphi 0, %s98
      %s116 = sphi 0, %s116
      %s118 = sphi 0, %s116
      %s119 = sphi 0, %s118
      %s133 = sphi 0, %s119
      %s137 = sphi 0, %s137
      %s139 = sphi 0, %s137
      %s140 = sphi 0, %s139
      %s154 = sphi 0, %s140
      %s160 = sphi 0, %s162
      %s163 = sphi 0, %s160
      %s164 = sphi 0, %s163
      %s180 = sphi 0, %s164
    $region4: #{tpu_custom_call.1} parent=1 // loop_header_branch
      %22 = sbr.rel (%p20) target = $region8
    $region5: #{tpu_custom_call.1} parent=1 // loop_body
      %s24 = ssub.s32 %s19, 1
      %s25 = ssub.s32 %s19, 2
      %s26 = sadd.s32 %s19, 1
      %s27 = ssub.s32 %s19, %s26
      %p28 = scmp.eq.s32.totalorder %s27, 0
      %s30 = sadd.s32 %s29, 1
      %s31 = scalar_select %p28, %s29, %s30
      %p34 = pneg %p28
      %p35 = scmp.eq.s32.totalorder %s19, 1
      %p36 = por %p34, %p35
      %p37 = scmp.ne.s32.totalorder %s29, %s32
      %p38 = scmp.eq.s32.totalorder %s19, 0
      %p39 = por %p37, %p38
      %p40 = scmp.ne.s32.totalorder %s29, %s32
      %p41 = scmp.eq.s32.totalorder %s24, 1
      %p42 = por %p40, %p41
      %p43 = scmp.ne.s32.totalorder %s32, %s33
      %p44 = scmp.eq.s32.totalorder %s24, 0
      %p45 = por %p43, %p44
      %p46 = scmp.ne.s32.totalorder %s32, %s33
      %p47 = scmp.eq.s32.totalorder %s25, 1
      %p48 = por %p46, %p47
      %p50 = scmp.ne.s32.totalorder %s33, %s49
      %p51 = scmp.eq.s32.totalorder %s25, 0
      %p52 = por %p50, %p51
      %s54 = sadd.s32 %s53, 1
      %p57 = scmp.eq.s32.totalorder %s19, 1
      %p58 = scmp.ne.s32.totalorder %s53, %s55
      %p59 = scmp.eq.s32.totalorder %s19, 0
      %p60 = por %p58, %p59
      %p61 = scmp.ne.s32.totalorder %s53, %s55
      %p62 = scmp.eq.s32.totalorder %s24, 1
      %p63 = por %p61, %p62
      %p64 = scmp.ne.s32.totalorder %s55, %s56
      %p65 = scmp.eq.s32.totalorder %s24, 0
      %p66 = por %p64, %p65
      %p67 = scmp.ne.s32.totalorder %s55, %s56
      %p68 = scmp.eq.s32.totalorder %s25, 1
      %p69 = por %p67, %p68
      %p71 = scmp.ne.s32.totalorder %s56, %s70
      %p72 = scmp.eq.s32.totalorder %s25, 0
      %p73 = por %p71, %p72
      %s75 = sadd.s32 %s74, 1
      %p78 = scmp.eq.s32.totalorder %s19, 1
      %p79 = scmp.ne.s32.totalorder %s74, %s76
      %p80 = scmp.eq.s32.totalorder %s19, 0
      %p81 = por %p79, %p80
      %p82 = scmp.ne.s32.totalorder %s74, %s76
      %p83 = scmp.eq.s32.totalorder %s24, 1
      %p84 = por %p82, %p83
      %p85 = scmp.ne.s32.totalorder %s76, %s77
      %p86 = scmp.eq.s32.totalorder %s24, 0
      %p87 = por %p85, %p86
      %p88 = scmp.ne.s32.totalorder %s76, %s77
      %p89 = scmp.eq.s32.totalorder %s25, 1
      %p90 = por %p88, %p89
      %p92 = scmp.ne.s32.totalorder %s77, %s91
      %p93 = scmp.eq.s32.totalorder %s25, 0
      %p94 = por %p92, %p93
      %s96 = sadd.s32 %s95, 1
      %p99 = scmp.eq.s32.totalorder %s19, 1
      %p100 = scmp.ne.s32.totalorder %s95, %s97
      %p101 = scmp.eq.s32.totalorder %s19, 0
      %p102 = por %p100, %p101
      %p103 = scmp.ne.s32.totalorder %s95, %s97
      %p104 = scmp.eq.s32.totalorder %s24, 1
      %p105 = por %p103, %p104
      %p106 = scmp.ne.s32.totalorder %s97, %s98
      %p107 = scmp.eq.s32.totalorder %s24, 0
      %p108 = por %p106, %p107
      %p109 = scmp.ne.s32.totalorder %s97, %s98
      %p110 = scmp.eq.s32.totalorder %s25, 1
      %p111 = por %p109, %p110
      %p113 = scmp.ne.s32.totalorder %s98, %s112
      %p114 = scmp.eq.s32.totalorder %s25, 0
      %p115 = por %p113, %p114
      %s117 = sadd.s32 %s116, 1
      %p120 = scmp.eq.s32.totalorder %s19, 1
      %p121 = scmp.ne.s32.totalorder %s116, %s118
      %p122 = scmp.eq.s32.totalorder %s19, 0
      %p123 = por %p121, %p122
      %p124 = scmp.ne.s32.totalorder %s116, %s118
      %p125 = scmp.eq.s32.totalorder %s24, 1
      %p126 = por %p124, %p125
      %p127 = scmp.ne.s32.totalorder %s118, %s119
      %p128 = scmp.eq.s32.totalorder %s24, 0
      %p129 = por %p127, %p128
      %p130 = scmp.ne.s32.totalorder %s118, %s119
      %p131 = scmp.eq.s32.totalorder %s25, 1
      %p132 = por %p130, %p131
      %p134 = scmp.ne.s32.totalorder %s119, %s133
      %p135 = scmp.eq.s32.totalorder %s25, 0
      %p136 = por %p134, %p135
      %s138 = sadd.s32 %s137, 1
      %p141 = scmp.eq.s32.totalorder %s19, 1
      %p142 = scmp.ne.s32.totalorder %s137, %s139
      %p143 = scmp.eq.s32.totalorder %s19, 0
      %p144 = por %p142, %p143
      %p145 = scmp.ne.s32.totalorder %s137, %s139
      %p146 = scmp.eq.s32.totalorder %s24, 1
      %p147 = por %p145, %p146
      %p148 = scmp.ne.s32.totalorder %s139, %s140
      %p149 = scmp.eq.s32.totalorder %s24, 0
      %p150 = por %p148, %p149
      %p151 = scmp.ne.s32.totalorder %s139, %s140
      %p152 = scmp.eq.s32.totalorder %s25, 1
      %p153 = por %p151, %p152
      %p155 = scmp.ne.s32.totalorder %s140, %s154
      %p156 = scmp.eq.s32.totalorder %s25, 0
      %p157 = por %p155, %p156
      %s158 = ssub.s32 %s19, %s26
      %p159 = scmp.eq.s32.totalorder %s158, 0
      %s161 = sadd.s32 %s160, 1
      %s162 = scalar_select %p159, %s160, %s161
      %p165 = pneg %p159
      %p166 = scmp.eq.s32.totalorder %s19, 1
      %p167 = por %p165, %p166
      %p168 = scmp.ne.s32.totalorder %s160, %s163
      %p169 = scmp.eq.s32.totalorder %s19, 0
      %p170 = por %p168, %p169
      %p171 = scmp.ne.s32.totalorder %s160, %s163
      %p172 = scmp.eq.s32.totalorder %s24, 1
      %p173 = por %p171, %p172
      %p174 = scmp.ne.s32.totalorder %s163, %s164
      %p175 = scmp.eq.s32.totalorder %s24, 0
      %p176 = por %p174, %p175
      %p177 = scmp.ne.s32.totalorder %s163, %s164
      %p178 = scmp.eq.s32.totalorder %s25, 1
      %p179 = por %p177, %p178
      %p181 = scmp.ne.s32.totalorder %s164, %s180
      %p182 = scmp.eq.s32.totalorder %s25, 0
      %p183 = por %p181, %p182
      %p184 = scmp.le.s32.totalorder 1, %s19
      %p185 = scmp.lt.s32.totalorder %s19, 3
      %p186 = pnand %p184, %p185
      %p187 = pneg %p186
      // Predicated region
      $region9: #{tpu_custom_call.1} parent=5 // pred_check
        _
      $region10: #{tpu_custom_call.1} parent=5 // pred_check_branch
        %189 = sbr.rel (%p186) target = $region12
      $region11: #{tpu_custom_call.1} parent=5 // pred_region
        %s190 = ssub.s32 %s19, 1
        // Predicated region
        $region13: #{tpu_custom_call.1} parent=11 // pred_check
          %p191 = pneg %p66
        $region14: #{tpu_custom_call.1} parent=11 // pred_check_branch
          %193 = sbr.rel (%p191) target = $region16
        $region15: #{tpu_custom_call.1} parent=11 // pred_region
          %s195 = ssub.s32 1536, 1536
          %196 = vsyncadd [#allocation6], %s195
          %s197 = sshll.u32 [#allocation5], 4
          %s198 = int_to_ptr.vmem [resolvable:$true] %s197
          %203 = dma.hbm_to_vmem [thread:$0]  %s1, 1536, %s198, [#allocation6], 64, 64, 4
        $region16: #{tpu_custom_call.1} parent=11 // pred_fallthru
          _
        // Predicated region
        $region17: #{tpu_custom_call.1} parent=11 // pred_check
          %p204 = pneg %p87
        $region18: #{tpu_custom_call.1} parent=11 // pred_check_branch
          %206 = sbr.rel (%p204) target = $region20
        $region19: #{tpu_custom_call.1} parent=11 // pred_region
          _
        $region20: #{tpu_custom_call.1} parent=11 // pred_fallthru
          _
        // Predicated region
        $region21: #{tpu_custom_call.1} parent=11 // pred_check
          %p207 = pneg %p108
        $region22: #{tpu_custom_call.1} parent=11 // pred_check_branch
          %209 = sbr.rel (%p207) target = $region24
        $region23: #{tpu_custom_call.1} parent=11 // pred_region
          %s211 = ssub.s32 384, 384
          %212 = vsyncadd [#allocation6], %s211
          %s213 = sshll.u32 [#allocation7], 4
          %s214 = int_to_ptr.vmem [resolvable:$true] %s213
          %219 = dma.hbm_to_vmem [thread:$0]  %s3, 384, %s214, [#allocation6], 128, 128, 8
        $region24: #{tpu_custom_call.1} parent=11 // pred_fallthru
          _
        // Predicated region
        $region25: #{tpu_custom_call.1} parent=11 // pred_check
          %p220 = pneg %p129
        $region26: #{tpu_custom_call.1} parent=11 // pred_check_branch
          %222 = sbr.rel (%p220) target = $region28
        $region27: #{tpu_custom_call.1} parent=11 // pred_region
          _
        $region28: #{tpu_custom_call.1} parent=11 // pred_fallthru
          _
        // Predicated region
        $region29: #{tpu_custom_call.1} parent=11 // pred_check
          %p223 = pneg %p150
        $region30: #{tpu_custom_call.1} parent=11 // pred_check_branch
          %225 = sbr.rel (%p223) target = $region32
        $region31: #{tpu_custom_call.1} parent=11 // pred_region
          _
        $region32: #{tpu_custom_call.1} parent=11 // pred_fallthru
          _
      $region12: #{tpu_custom_call.1} parent=5 // pred_fallthru
        _
      %p226 = scmp.lt.s32.totalorder %s19, 2
      // Predicated region
      $region33: #{tpu_custom_call.1} parent=5 // pred_check
        %p227 = pneg %p226
      $region34: #{tpu_custom_call.1} parent=5 // pred_check_branch
        %229 = sbr.rel (%p227) target = $region36
      $region35: #{tpu_custom_call.1} parent=5 // pred_region
        // Predicated region
        $region37: #{tpu_custom_call.1} parent=35 // pred_check
          %p230 = pneg %p39
        $region38: #{tpu_custom_call.1} parent=35 // pred_check_branch
          %232 = sbr.rel (%p230) target = $region40
        $region39: #{tpu_custom_call.1} parent=35 // pred_region
          %s233 = sand.u32 %s29, 1
          %s234 = scalar_lea.sflag [#allocation3], %s233
          %s235 = sand.u32 %s29, 1
          %s236 = smul.addr %s235, 32
          %s237 = scalar_lea.vmem [#allocation2], %s236
          %s239 = ssub.s32 512, 512
          %240 = vsyncadd %s234, %s239
          %s241 = smul.addr %s19, 4
          %s242 = smul.addr %s241, 128
          %s243 = scalar_lea.hbm %s0, %s242
          %s244 = sshll.u32 %s237, 4
          %s245 = int_to_ptr.vmem [resolvable:$true] %s244
          %250 = dma.hbm_to_vmem [thread:$0]  %s243, 512, %s245, %s234, 256, 256, 16
        $region40: #{tpu_custom_call.1} parent=35 // pred_fallthru
          _
      $region36: #{tpu_custom_call.1} parent=5 // pred_fallthru
        _
      %p251 = scmp.le.s32.totalorder 1, %s19
      %p252 = scmp.lt.s32.totalorder %s19, 3
      %p253 = pnand %p251, %p252
      %p254 = pneg %p253
      // Predicated region
      $region41: #{tpu_custom_call.1} parent=5 // pred_check
        _
      $region42: #{tpu_custom_call.1} parent=5 // pred_check_branch
        %256 = sbr.rel (%p253) target = $region44
      $region43: #{tpu_custom_call.1} parent=5 // pred_region
        %s257 = ssub.s32 %s19, 1
        %s258 = sand.u32 %s32, 1
        %s259 = scalar_lea.sflag [#allocation3], %s258
        %s260 = sand.u32 %s32, 1
        %s261 = smul.addr %s260, 32
        %s262 = scalar_lea.vmem [#allocation2], %s261
        // Predicated region
        $region45: #{tpu_custom_call.1} parent=43 // pred_check
          %p263 = pneg %p45
        $region46: #{tpu_custom_call.1} parent=43 // pred_check_branch
          %265 = sbr.rel (%p263) target = $region48
        $region47: #{tpu_custom_call.1} parent=43 // pred_region
          %266 = dma.done %s259, 512
        $region48: #{tpu_custom_call.1} parent=43 // pred_fallthru
          _
        // Predicated region
        $region49: #{tpu_custom_call.1} parent=43 // pred_check
          %p267 = pneg %p66
        $region50: #{tpu_custom_call.1} parent=43 // pred_check_branch
          %269 = sbr.rel (%p267) target = $region52
        $region51: #{tpu_custom_call.1} parent=43 // pred_region
          %270 = dma.done [#allocation6], 1536
        $region52: #{tpu_custom_call.1} parent=43 // pred_fallthru
          _
        // Predicated region
        $region53: #{tpu_custom_call.1} parent=43 // pred_check
          %p271 = pneg %p108
        $region54: #{tpu_custom_call.1} parent=43 // pred_check_branch
          %273 = sbr.rel (%p271) target = $region56
        $region55: #{tpu_custom_call.1} parent=43 // pred_region
          %274 = dma.done [#allocation6], 384
        $region56: #{tpu_custom_call.1} parent=43 // pred_fallthru
          _
        %s275 = sand.u32 %s32, 1
        %s276 = scalar_lea.sflag [#allocation3], %s275
        %s277 = sand.u32 %s32, 1
        %s278 = smul.addr %s277, 32
        %s279 = scalar_lea.vmem [#allocation2], %s278
        %p280 = pneg %p45
        %p281 = pneg %p42
        %p282 = pneg %p66
        %p283 = pneg %p63
        %p284 = pneg %p87
        %p285 = pneg %p84
        %p286 = pneg %p108
        %p287 = pneg %p105
        %p288 = pneg %p129
        %p289 = pneg %p126
        %p290 = pneg %p150
        %p291 = pneg %p147
        %p292 = pneg %p176
        %p293 = pneg %p173
        %s294 = sand.u32 %s163, 1
        %s295 = scalar_lea.sflag [#allocation4], %s294
        %s296 = sand.u32 %s163, 1
        %s297 = smul.addr %s296, 128
        %s298 = scalar_lea.vmem [#allocation8], %s297
        %v300 = vld [vmem:[%s262] sm:$0xff]
        %v301 = vld [vmem:[%s262 + $0x8] sm:$0xff]
        %v302 = vld [vmem:[%s262 + $0x10] sm:$0xff]
        %v303 = vld [vmem:[%s262 + $0x18] sm:$0xff]
        %v304 = vpack.c.bf16 %v302, %v300
        %v305 = vpack.c.bf16 %v303, %v301
        %v306 = vld [vmem:[#allocation5] sm:$0xf]
        %v307 = vld [vmem:[#allocation5 + $0x4] sm:$0xf]
        %v308 = vld [vmem:[#allocation5 + $0x8] sm:$0xf]
        %v309 = vld [vmem:[#allocation5 + $0xc] sm:$0xf]
        %v310 = vld [vmem:[#allocation5 + $0x10] sm:$0xf]
        %v311 = vld [vmem:[#allocation5 + $0x14] sm:$0xf]
        %v312 = vld [vmem:[#allocation5 + $0x18] sm:$0xf]
        %v313 = vld [vmem:[#allocation5 + $0x1c] sm:$0xf]
        %v314 = vld [vmem:[#allocation5 + $0x20] sm:$0xf]
        %v315 = vld [vmem:[#allocation5 + $0x24] sm:$0xf]
        %v316 = vld [vmem:[#allocation5 + $0x28] sm:$0xf]
        %v317 = vld [vmem:[#allocation5 + $0x2c] sm:$0xf]
        %v318 = vld [vmem:[#allocation5 + $0x30] sm:$0xf]
        %v319 = vld [vmem:[#allocation5 + $0x34] sm:$0xf]
        %v320 = vld [vmem:[#allocation5 + $0x38] sm:$0xf]
        %v321 = vld [vmem:[#allocation5 + $0x3c] sm:$0xf]
        %v322 = vld [vmem:[#allocation5 + $0x40] sm:$0xf]
        %v323 = vld [vmem:[#allocation5 + $0x44] sm:$0xf]
        %v324 = vld [vmem:[#allocation5 + $0x48] sm:$0xf]
        %v325 = vld [vmem:[#allocation5 + $0x4c] sm:$0xf]
        %v326 = vld [vmem:[#allocation5 + $0x50] sm:$0xf]
        %v327 = vld [vmem:[#allocation5 + $0x54] sm:$0xf]
        %v328 = vld [vmem:[#allocation5 + $0x58] sm:$0xf]
        %v329 = vld [vmem:[#allocation5 + $0x5c] sm:$0xf]
        %v354 = vunpack.c.l.b16 %v306
        %v355 = vunpack.c.l.b16 %v307
        %v356 = vunpack.c.l.b16 %v308
        %v357 = vunpack.c.l.b16 %v309
        %v358 = vunpack.c.l.b16 %v310
        %v359 = vunpack.c.l.b16 %v311
        %v360 = vunpack.c.l.b16 %v312
        %v361 = vunpack.c.l.b16 %v313
        %v362 = vunpack.c.l.b16 %v314
        %v363 = vunpack.c.l.b16 %v315
        %v364 = vunpack.c.l.b16 %v316
        %v365 = vunpack.c.l.b16 %v317
        %v366 = vunpack.c.l.b16 %v318
        %v367 = vunpack.c.l.b16 %v319
        %v368 = vunpack.c.l.b16 %v320
        %v369 = vunpack.c.l.b16 %v321
        %v370 = vunpack.c.l.b16 %v322
        %v371 = vunpack.c.l.b16 %v323
        %v372 = vunpack.c.l.b16 %v324
        %v373 = vunpack.c.l.b16 %v325
        %v374 = vunpack.c.l.b16 %v326
        %v375 = vunpack.c.l.b16 %v327
        %v376 = vunpack.c.l.b16 %v328
        %v377 = vunpack.c.l.b16 %v329
        %v378 = vpack.c.b16 %v355, %v354
        %v379 = vpack.c.b16 %v357, %v356
        %v380 = vpack.c.b16 %v359, %v358
        %v381 = vpack.c.b16 %v361, %v360
        %v382 = vpack.c.b16 %v363, %v362
        %v383 = vpack.c.b16 %v365, %v364
        %v384 = vpack.c.b16 %v367, %v366
        %v385 = vpack.c.b16 %v369, %v368
        %v386 = vpack.c.b16 %v371, %v370
        %v387 = vpack.c.b16 %v373, %v372
        %v388 = vpack.c.b16 %v375, %v374
        %v389 = vpack.c.b16 %v377, %v376
        %vm402 = vcmask 523264
        %v404 = vsel %vm402, %v305, 0
        %406 = vmatprep.subr.bf16.mxu0 0
        %407 = vmatpush1.bf16.msra.mxu0 %v385
        %408 = vmatprep.subr.bf16.mxu0 0
        %409 = vmatpush1.bf16.msra.mxu0 %v384
        %410 = vmatprep.subr.bf16.mxu0 0
        %411 = vmatpush1.bf16.msra.mxu0 %v383
        %412 = vmatprep.subr.bf16.mxu0 0
        %413 = vmatpush1.bf16.msra.mxu0 %v382
        %414 = vmatprep.subr.bf16.mxu0 0
        %415 = vmatpush1.bf16.msra.mxu0 %v381
        %416 = vmatprep.subr.bf16.mxu0 0
        %417 = vmatpush1.bf16.msra.mxu0 %v380
        %418 = vmatprep.subr.bf16.mxu0 0
        %419 = vmatpush1.bf16.msra.mxu0 %v379
        %420 = vmatprep.subr.bf16.mxu0 0
        %421 = vmatpush1.bf16.msra.mxu0 %v378
        %422 = vmatprep.subr.bf16.mxu0 0
        %423 = vmatpush2.bf16.msra.mxu0 0
        %424 = vmatprep.subr.bf16.mxu0 0
        %425 = vmatpush2.bf16.msra.mxu0 0
        %426 = vmatprep.subr.bf16.mxu0 0
        %427 = vmatpush2.bf16.msra.mxu0 0
        %428 = vmatprep.subr.bf16.mxu0 0
        %429 = vmatpush2.bf16.msra.mxu0 0
        %430 = vmatprep.subr.bf16.mxu0 0
        %431 = vmatpush2.bf16.msra.mxu0 %v389
        %432 = vmatprep.subr.bf16.mxu0 0
        %433 = vmatpush2.bf16.msra.mxu0 %v388
        %434 = vmatprep.subr.bf16.mxu0 0
        %435 = vmatpush2.bf16.msra.mxu0 %v387
        %436 = vmatprep.subr.bf16.mxu0 0
        %437 = vmatpush2.bf16.msra.mxu0 %v386
        %438 = vmatprep.mubr.bf16.mxu0 %v404
        %439 = vmatmul.mubr.bf16.gmra.mxu0 %v304
        %v440 = vpop.f32.mrf.mxu0
        %v441 = vadd.f32 0.0, %v440
        %v442 = vpop.f32.mrf.mxu0
        %v443 = vpop.f32.mrf.mxu0
        %v444 = vadd.f32 0.0, %v443
        %v445 = vpop.f32.mrf.mxu0
        %446 = vdwg.mxu0
        %v447 = vld [vmem:[%s2] sm:$0x1]
        %vm450 = vcmask 1040384
        %v451 = vrot.slane %v441, 7
        %v452 = vrot.slane %v444, 7
        %v453 = vsel %vm450, %v451, %v452
        %v457 = vsel %vm450, %v447, %v451
        %v458 = vld [vmem:[#allocation7] sm:$0xff]
        %v459 = vld [vmem:[#allocation7 + $0x8] sm:$0xff]
        %v460 = vld [vmem:[#allocation7 + $0x10] sm:$0x1]
        %v461 = vadd.f32 %v457, %v458
        %v462 = vadd.f32 %v453, %v459
        %v463 = vadd.f32 %v452, %v460
        %v464 = vld [vmem:[%s4] sm:$0x1]
        %v465 = vld [vmem:[%s5] sm:$0x1]
        %466 = vadd.xlane.f32.xlu0 %v461
        %v467 = vpop.xlane.xlu0 %466
        %468 = vadd.xlane.f32.xlu0 %v462
        %v469 = vpop.xlane.xlu0 %468
        %v470 = vsel %vm450, %v463, 0.0
        %471 = vadd.xlane.f32.xlu0 %v470
        %v472 = vpop.xlane.xlu0 %471
        %v473 = vrcp.pop 128.0
        %v474 = vmul.f32 %v467, %v473
        %v475 = vmul.f32 %v469, %v473
        %v476 = vmul.f32 %v472, %v473
        %v477 = vsub.f32 %v461, %v474
        %v478 = vsub.f32 %v462, %v475
        %v479 = vsub.f32 %v463, %v476
        %v480 = vmul.f32 %v477, %v477
        %v481 = vmul.f32 %v478, %v478
        %v482 = vmul.f32 %v479, %v479
        %483 = vadd.xlane.f32.xlu0 %v480
        %v484 = vpop.xlane.xlu0 %483
        %485 = vadd.xlane.f32.xlu0 %v481
        %v486 = vpop.xlane.xlu0 %485
        %v487 = vsel %vm450, %v482, 0.0
        %488 = vadd.xlane.f32.xlu0 %v487
        %v489 = vpop.xlane.xlu0 %488
        %v490 = vmul.f32 %v484, %v473
        %v491 = vmul.f32 %v486, %v473
        %v492 = vmul.f32 %v489, %v473
        %v493 = vadd.f32 %v490, 1e-05
        %v494 = vadd.f32 %v491, 1e-05
        %v495 = vadd.f32 %v492, 1e-05
        %v496 = vrsqrt.pop %v493
        %v497 = vrsqrt.pop %v494
        %v498 = vrsqrt.pop %v495
        %v499 = vmul.f32 %v477, %v496
        %v500 = vmul.f32 %v478, %v497
        %v501 = vmul.f32 %v479, %v498
        %v503 = vlaneseq
        %v504 = vshrl.u32 %v503, 7
        %v505 = vsub.s32 0, %v504
        %v506 = vrot.slane %v464, %v505
        %v508 = vmul.f32 %v499, %v506
        %v509 = vmul.f32 %v500, %v506
        %v510 = vmul.f32 %v501, %v506
        %v512 = vlaneseq
        %v513 = vshrl.u32 %v512, 7
        %v514 = vsub.s32 0, %v513
        %v515 = vrot.slane %v465, %v514
        %v517 = vadd.f32 %v508, %v515
        %v518 = vadd.f32 %v509, %v515
        %v519 = vadd.f32 %v510, %v515
        %520 = vst [vmem:[%s298] sm:$0xff] 0.0
        %521 = vst [vmem:[%s298 + $0x8] sm:$0xff] 0.0
        %522 = vst [vmem:[%s298 + $0x10] sm:$0xff] 0.0
        %523 = vst [vmem:[%s298 + $0x18] sm:$0xff] 0.0
        %524 = vst [vmem:[%s298 + $0x20] sm:$0xff] 0.0
        %525 = vst [vmem:[%s298 + $0x28] sm:$0xff] 0.0
        %526 = vst [vmem:[%s298 + $0x30] sm:$0xff] 0.0
        %527 = vst [vmem:[%s298 + $0x38] sm:$0xff] 0.0
        %528 = vst [vmem:[%s298 + $0x40] sm:$0xff] 0.0
        %529 = vst [vmem:[%s298 + $0x48] sm:$0xff] 0.0
        %530 = vst [vmem:[%s298 + $0x50] sm:$0xff] 0.0
        %531 = vst [vmem:[%s298 + $0x58] sm:$0xff] 0.0
        %532 = vst [vmem:[%s298 + $0x60] sm:$0xff] 0.0
        %533 = vst [vmem:[%s298 + $0x68] sm:$0xff] 0.0
        %534 = vst [vmem:[%s298 + $0x70] sm:$0xff] 0.0
        %535 = vst [vmem:[%s298 + $0x78] sm:$0xff] 0.0
        %536 = vst [vmem:[%s298] sm:$0xff] %v517
        %537 = vst [vmem:[%s298 + $0x8] sm:$0xff] %v518
        %538 = vst [vmem:[%s298 + $0x10] sm:$0x1] %v519
        %s539 = sand.u32 %s163, 1
        %s540 = scalar_lea.sflag [#allocation4], %s539
        %s541 = sand.u32 %s163, 1
        %s542 = smul.addr %s541, 128
        %s543 = scalar_lea.vmem [#allocation8], %s542
        // Predicated region
        $region57: #{tpu_custom_call.1} parent=43 // pred_check
          %p544 = pneg %p173
        $region58: #{tpu_custom_call.1} parent=43 // pred_check_branch
          %546 = sbr.rel (%p544) target = $region60
        $region59: #{tpu_custom_call.1} parent=43 // pred_region
          %s548 = ssub.s32 2048, 2048
          %549 = vsyncadd %s540, %s548
          %s550 = smul.addr %s24, 16
          %s551 = smul.addr %s550, 128
          %s552 = scalar_lea.hbm %s6, %s551
          %s553 = sshll.u32 %s543, 4
          %s554 = int_to_ptr.vmem [resolvable:$true] %s553
          %559 = dma.vmem_to_hbm [thread:$0]  %s554, 2048, %s552, %s540, 128, 128, 8
        $region60: #{tpu_custom_call.1} parent=43 // pred_fallthru
          _
      $region44: #{tpu_custom_call.1} parent=5 // pred_fallthru
        _
      %p560 = scmp.le.s32.totalorder 2, %s19
      // Predicated region
      $region61: #{tpu_custom_call.1} parent=5 // pred_check
        %p561 = pneg %p560
      $region62: #{tpu_custom_call.1} parent=5 // pred_check_branch
        %563 = sbr.rel (%p561) target = $region64
      $region63: #{tpu_custom_call.1} parent=5 // pred_region
        %s564 = ssub.s32 %s19, 2
        // Predicated region
        $region65: #{tpu_custom_call.1} parent=63 // pred_check
          %p565 = pneg %p179
        $region66: #{tpu_custom_call.1} parent=63 // pred_check_branch
          %567 = sbr.rel (%p565) target = $region68
        $region67: #{tpu_custom_call.1} parent=63 // pred_region
          %s568 = sand.u32 %s164, 1
          %s569 = scalar_lea.sflag [#allocation4], %s568
          %s570 = sand.u32 %s164, 1
          %s571 = smul.addr %s570, 128
          %s572 = scalar_lea.vmem [#allocation8], %s571
          %573 = dma.done %s569, 2048
        $region68: #{tpu_custom_call.1} parent=63 // pred_fallthru
          _
      $region64: #{tpu_custom_call.1} parent=5 // pred_fallthru
        _
    $region6: #{tpu_custom_call.1} parent=1 // loop_footer
      %s23 = sadd.s32 1, %s19
    $region7: #{tpu_custom_call.1} parent=1 // loop_footer_branch
      %18 = sbr.rel target = $region3
    $region8: #{tpu_custom_call.1} parent=1 // loop_exit
      _
    %574 = vsyncpa [#allocation3], 1
    %s575 = scalar_lea.sflag [#allocation3], 1
    %576 = vsyncpa %s575, 1
    %577 = vsyncpa [#allocation6], 1
    %578 = vsyncpa [#allocation4], 1
    %s579 = scalar_lea.sflag [#allocation4], 1
    %580 = vsyncpa %s579, 1

</llo_original>
